<compile_context>
chip_gen: v6e
topology: v6e:2x2x1
jax: 0.10.0
libtpu: 0.0.40
codegen_flags: <defaults>
</compile_context>

<pallas_src>
import functools

import jax
import jax.numpy as jnp
from jax.experimental import pallas as pl
from jax.experimental.pallas import tpu as pltpu

CL = 128          # lane-dense padded channel width for x / x_l / x_r / output
TJ = 128          # source-node tile (softmax reduction axis, lanes of e / alpha)
NEG_SLOPE = 0.2
MASK_BIAS = -1e30


def _round_up(x, m):
    return ((x + m - 1) // m) * m


def _vmem_limit(ti, c_pad):
    """Per-call VMEM budget derived from footprint + chip capacity."""
    need = 4 * (2 * ti * CL            # x_r (double buffered across row tiles)
                + 2 * c_pad * TJ       # x_l^T tiles
                + 2 * TJ * CL          # x_l tiles
                + ti * TJ              # adj tiles (bf16; keep slack)
                + 2 * ti * CL          # output block
                + ti * (CL + 2))       # scratch m / s / acc
    need = max(4 * need, 16 * 1024 * 1024)
    cap = 128 * 1024 * 1024
    try:
        cap = int(pltpu.get_tpu_info().vmem_capacity_bytes)
    except Exception:
        pass
    return int(min(need, int(0.75 * cap)))    # ~96 MiB v5e/v6e, ~48 MiB v7x


# ------------------------- projection kernel (per layer) ----------------------
def proj_kernel(x_ref, w_ref, b_ref, xl_ref, xr_ref, xlt_ref, *, c_pad, mxu_dtype):
    x = x_ref[...]                                            # [TI, CL]
    w = w_ref[...]                                            # [CL, 2*CL] = [W_l | W_r]
    if jnp.dtype(mxu_dtype) != jnp.dtype(jnp.float32):
        x = x.astype(mxu_dtype)
        w = w.astype(mxu_dtype)
    y = jnp.dot(x, w, preferred_element_type=jnp.float32) + b_ref[...]
    xl = y[:, :CL]
    xl_ref[...] = xl                                          # source-side features
    xr_ref[...] = y[:, CL:]                                   # target-side features
    # Hoisted transpose: once per row tile (not once per source tile); only the
    # real (padded-to-8) channels are kept.
    xlt_ref[...] = xl.T[:c_pad, :]


def _projection(src, w, b, *, c_pad, ti, mxu_dtype, vmem_limit):
    n_pad = src.shape[0]
    ni = n_pad // ti
    kernel = functools.partial(proj_kernel, c_pad=c_pad, mxu_dtype=mxu_dtype)
    return pl.pallas_call(
        kernel,
        out_shape=(jax.ShapeDtypeStruct((n_pad, CL), jnp.float32),      # x_l
                   jax.ShapeDtypeStruct((n_pad, CL), jnp.float32),      # x_r
                   jax.ShapeDtypeStruct((c_pad, n_pad), jnp.float32)),  # x_l^T
        grid_spec=pltpu.PrefetchScalarGridSpec(
            num_scalar_prefetch=0,
            grid=(ni,),
            in_specs=[
                pl.BlockSpec((ti, CL), lambda i: (i, 0)),
                pl.BlockSpec((CL, 2 * CL), lambda i: (0, 0)),
                pl.BlockSpec((1, 2 * CL), lambda i: (0, 0)),
            ],
            out_specs=[
                pl.BlockSpec((ti, CL), lambda i: (i, 0)),
                pl.BlockSpec((ti, CL), lambda i: (i, 0)),
                pl.BlockSpec((c_pad, ti), lambda i: (0, i)),
            ]),
        compiler_params=pltpu.CompilerParams(
            dimension_semantics=("parallel",),
            vmem_limit_bytes=vmem_limit),
    )(src, w, b)


# ----------------------- attention / aggregation kernel -----------------------
def gatv2_attn_kernel(xr_ref, xlt_ref, xl_ref, adj_ref, att_ref, bo_ref,
                      o_ref, m_ref, s_ref, acc_ref,
                      *, n_ch, apply_relu, pairwise_dtype, mxu_dtype):
    j = pl.program_id(1)                      # source tile (reduction axis, last)
    nj = pl.num_programs(1)

    @pl.when(j == 0)
    def _init():
        m_ref[...] = jnp.full(m_ref.shape, MASK_BIAS, jnp.float32)
        s_ref[...] = jnp.zeros(s_ref.shape, jnp.float32)
        acc_ref[...] = jnp.zeros(acc_ref.shape, jnp.float32)

    # ---- attention logits: start from the additive adjacency bias (no masks) ----
    e = adj_ref[...].astype(jnp.float32)                      # [TI, TJ]
    f32_pairwise = jnp.dtype(pairwise_dtype) == jnp.dtype(jnp.float32)
    for c in range(n_ch):
        a_pos = att_ref[c]                                    # SMEM scalar: att_c
        a_neg = att_ref[CL + c]                               # SMEM scalar: att_c * slope
        col = xr_ref[:, c:c + 1]                              # [TI, 1]
        row = xlt_ref[c:c + 1, :]                             # [1, TJ]
        if f32_pairwise:
            t = col + row
            e = e + t * jnp.where(t > 0.0, a_pos, a_neg)      # folded leaky_relu * att
        else:
            # bf16 pairwise path (v6e/v7x): cmp/select/mul stay packed bf16,
            # upcast only when accumulating into the f32 logits.
            tb = col.astype(pairwise_dtype) + row.astype(pairwise_dtype)
            contrib = tb * jnp.where(tb > 0, a_pos.astype(pairwise_dtype),
                                     a_neg.astype(pairwise_dtype))
            e = e + contrib.astype(jnp.float32)

    # ---- online softmax (flash-style) --------------------------------------------
    m_prev = m_ref[...]
    m_new = jnp.maximum(m_prev, jnp.max(e, axis=-1, keepdims=True))
    p = jnp.exp(e - m_new)                    # masked entries underflow to 0
    corr = jnp.exp(m_prev - m_new)            # wipes any all-masked leading tiles
    s_ref[...] = corr * s_ref[...] + jnp.sum(p, axis=-1, keepdims=True)
    xl = xl_ref[...]                                          # [TJ, CL]
    if jnp.dtype(mxu_dtype) != jnp.dtype(jnp.float32):
        p = p.astype(mxu_dtype)
        xl = xl.astype(mxu_dtype)
    acc_ref[...] = corr * acc_ref[...] + jnp.dot(
        p, xl, preferred_element_type=jnp.float32)
    m_ref[...] = m_new

    @pl.when(j == nj - 1)
    def _finalize():
        # Exact reciprocal: once per row tile, keeps numerics tight.
        inv = pl.reciprocal(jnp.maximum(s_ref[...], 1e-20), approx=False)
        out = acc_ref[...] * inv + bo_ref[...]
        if apply_relu:
            out = jnp.maximum(out, 0.0)
        o_ref[...] = out.astype(o_ref.dtype)


def _gat_attention(xl, xr, xlt, adj_bias, att_tab, bias_out, *, n_ch, c_pad, ti,
                   apply_relu, pairwise_dtype, mxu_dtype, vmem_limit):
    n_pad = xr.shape[0]
    ni = n_pad // ti
    nj = n_pad // TJ
    kernel = functools.partial(
        gatv2_attn_kernel, n_ch=n_ch, apply_relu=apply_relu,
        pairwise_dtype=pairwise_dtype, mxu_dtype=mxu_dtype)

    cost = pl.CostEstimate(
        flops=int(n_pad * n_pad * (5 * n_ch + 12) + 2 * n_pad * n_pad * CL),
        transcendentals=int(n_pad * n_pad + 2 * n_pad * nj),
        bytes_accessed=int(4 * n_pad * CL                     # x_r
                           + ni * 4 * c_pad * n_pad           # x_l^T (per row tile)
                           + ni * 4 * n_pad * CL              # x_l   (per row tile)
                           + 2 * n_pad * n_pad                # adj bias (bf16)
                           + 4 * n_pad * CL))                 # output

    return pl.pallas_call(
        kernel,
        out_shape=jax.ShapeDtypeStruct((n_pad, CL), jnp.float32),
        grid_spec=pltpu.PrefetchScalarGridSpec(
            num_scalar_prefetch=0,
            grid=(ni, nj),                       # (target row tiles, source tiles)
            in_specs=[
                pl.BlockSpec((ti, CL), lambda i, j: (i, 0)),        # x_r row tile
                pl.BlockSpec((c_pad, TJ), lambda i, j: (0, j)),     # x_l^T source tile
                pl.BlockSpec((TJ, CL), lambda i, j: (j, 0)),        # x_l source tile
                pl.BlockSpec((ti, TJ), lambda i, j: (i, j)),        # adj additive bias
                pl.BlockSpec(memory_space=pltpu.MemorySpace.SMEM),  # att scalar table
                pl.BlockSpec((1, CL), lambda i, j: (0, 0)),         # output bias
            ],
            out_specs=pl.BlockSpec((ti, CL), lambda i, j: (i, 0)),
            scratch_shapes=[
                pltpu.VMEM((ti, 1), jnp.float32),    # running max m
                pltpu.VMEM((ti, 1), jnp.float32),    # running denom s
                pltpu.VMEM((ti, CL), jnp.float32),   # output accumulator
            ]),
        compiler_params=pltpu.CompilerParams(
            # Row tiles are independent -> "parallel" (v7x megacore); the source
            # axis is the softmax reduction -> "arbitrary" and last.
            dimension_semantics=("parallel", "arbitrary"),
            vmem_limit_bytes=vmem_limit),
        cost_estimate=cost,
    )(xr, xlt, xl, adj_bias, att_tab, bias_out)


# ---------------------------------- wrapper ------------------------------------
def _pack_params(p, in_dim):
    """Zero-pad; concatenate W_l|W_r; precompute the SMEM att scalar table."""
    c = p["wl"].shape[1]
    w = jnp.zeros((CL, 2 * CL), jnp.float32)
    w = w.at[:in_dim, :c].set(p["wl"])
    w = w.at[:in_dim, CL:CL + c].set(p["wr"])
    b = jnp.zeros((1, 2 * CL), jnp.float32)
    b = b.at[:, :c].set(p["bl"])
    b = b.at[:, CL:CL + c].set(p["br"])
    att = jnp.zeros((2 * CL,), jnp.float32)
    att = att.at[:c].set(p["att"][0])                      # a_pos = att_c
    att = att.at[CL:CL + c].set(p["att"][0] * NEG_SLOPE)   # a_neg = att_c * slope
    bo = jnp.zeros((1, CL), jnp.float32).at[:, :c].set(p["bout"])
    return w, b, att, bo


def encoder_forward(x, adj, p1, p2, *, pairwise_dtype=jnp.float32,
                    mxu_dtype=jnp.float32):
    """Encoder.forward: conv2(relu(conv1(x))) with a dense adjacency mask.

    pairwise_dtype / mxu_dtype = jnp.bfloat16 are the recommended settings on
    v6e / v7x; float32 defaults keep v5e-friendly, bit-tight numerics.
    """
    n, f = x.shape
    c1 = p1["wl"].shape[1]              # hidden_dim * heads
    c2 = p2["wl"].shape[1]              # out_dim * 2
    assert f <= CL and c1 <= CL and c2 <= CL, "feature dims must fit one lane tile"

    n_pad = _round_up(max(n, TJ), TJ)
    ti = 256 if (n_pad % 256 == 0 and n_pad >= 256) else 128   # target-row tile
    c1_pad = _round_up(c1, 8)
    c2_pad = _round_up(c2, 8)

    x_p = jnp.zeros((n_pad, CL), jnp.float32).at[:n, :f].set(x.astype(jnp.float32))

    # Additive-bias adjacency (0.0 on edges, -1e30 elsewhere, padding masked),
    # streamed in bf16 -> half the HBM traffic / half-size double buffers.
    adj_bias = jnp.full((n_pad, n_pad), MASK_BIAS, jnp.bfloat16)
    adj_bias = adj_bias.at[:n, :n].set(
        jnp.where(adj > 0, 0.0, MASK_BIAS).astype(jnp.bfloat16))

    w1, b1, att1, bo1 = _pack_params(p1, f)
    w2, b2, att2, bo2 = _pack_params(p2, c1)

    def layer(src, w, b, att, bo, c, c_pad, apply_relu):
        vmem_limit = _vmem_limit(ti, c_pad)
        xl, xr, xlt = _projection(src, w, b, c_pad=c_pad, ti=ti,
                                  mxu_dtype=mxu_dtype, vmem_limit=vmem_limit)
        return _gat_attention(xl, xr, xlt, adj_bias, att, bo,
                              n_ch=c, c_pad=c_pad, ti=ti, apply_relu=apply_relu,
                              pairwise_dtype=pairwise_dtype, mxu_dtype=mxu_dtype,
                              vmem_limit=vmem_limit)

    h = layer(x_p, w1, b1, att1, bo1, c1, c1_pad, True)     # conv1 + ReLU
    out = layer(h, w2, b2, att2, bo2, c2, c2_pad, False)    # conv2
    return out[:n, :c2]


# ----------------------------- pure-JAX reference ------------------------------
def gatv2_ref(x, adj, p, apply_relu):
    x_l = x @ p["wl"] + p["bl"]
    x_r = x @ p["wr"] + p["br"]
    z = x_r[:, None, :] + x_l[None, :, :]
    z = jnp.where(z > 0, z, NEG_SLOPE * z)
    e = jnp.sum(z * p["att"][None, :, :], axis=-1)
    mask = adj > 0.0
    e = jnp.where(mask, e, MASK_BIAS)
    m = jnp.max(e, axis=-1, keepdims=True)
    pr = jnp.where(mask, jnp.exp(e - m), 0.0)
    alpha = pr / jnp.sum(pr, axis=-1, keepdims=True)
    out = alpha @ x_l + p["bout"]
    return jnp.maximum(out, 0.0) if apply_relu else out


def encoder_ref(x, adj, p1, p2):
    return gatv2_ref(gatv2_ref(x, adj, p1, True), adj, p2, False)


# -------------------------------- param init -----------------------------------
def make_gatv2_params(key, in_dim, out_dim):
    ks = jax.random.split(key, 6)
    s_in = 1.0 / jnp.sqrt(jnp.float32(in_dim))
    s_c = 1.0 / jnp.sqrt(jnp.float32(out_dim))
    return {
        "wl":   jax.random.normal(ks[0], (in_dim, out_dim), jnp.float32) * s_in,
        "bl":   jax.random.normal(ks[1], (1, out_dim), jnp.float32) * 0.1,
        "wr":   jax.random.normal(ks[2], (in_dim, out_dim), jnp.float32) * s_in,
        "br":   jax.random.normal(ks[3], (1, out_dim), jnp.float32) * 0.1,
        "att":  jax.random.normal(ks[4], (1, out_dim), jnp.float32) * s_c,
        "bout": jax.random.normal(ks[5], (1, out_dim), jnp.float32) * 0.1,
    }


if __name__ == "__main__":
    # Small synthetic graph consistent with Encoder(in_dim, hidden_dim, out_dim, heads=1)
    N, E = 16, 40
    in_dim, hidden_dim, out_dim, heads = 8, 16, 4, 1

    key = jax.random.PRNGKey(0)
    k_x, k_src, k_dst, k_p1, k_p2 = jax.random.split(key, 5)

    x = jax.random.normal(k_x, (N, in_dim), jnp.float32)
    src = jax.random.randint(k_src, (E,), 0, N)
    dst = jax.random.randint(k_dst, (E,), 0, N)

    # Dense adjacency mask (plain-JAX glue): adj[target, source]; add self-loops.
    adj = jnp.zeros((N, N), jnp.float32).at[dst, src].set(1.0)
    adj = adj.at[jnp.arange(N), jnp.arange(N)].set(1.0)

    # conv1: GATv2Conv(in_dim, hidden_dim, heads=1), concat=True
    p1 = make_gatv2_params(k_p1, in_dim, hidden_dim * heads)
    # conv2: GATv2Conv(hidden_dim*heads, out_dim*2, heads=1, concat=False)
    p2 = make_gatv2_params(k_p2, hidden_dim * heads, out_dim * 2)

    # pairwise_dtype=mxu_dtype=jnp.bfloat16 are the recommended settings on
    # v6e/v7x; float32 defaults keep this correctness check bit-tight.
    out = encoder_forward(x, adj, p1, p2)
    out = jax.block_until_ready(out)

    ref = encoder_ref(x, adj, p1, p2)
    assert out.shape == (N, out_dim * 2), out.shape
    err = float(jnp.max(jnp.abs(out - ref)))
    assert err < 1e-3, err

    print("KERNEL_OK")
</pallas_src>

<mosaic_0001>
module attributes {stable_mosaic.version = 11 : i64} {
  func.func @proj_kernel(%arg0: i32, %arg1: memref<128x128xf32, #tpu.memory_space<vmem>>, %arg2: memref<128x256xf32, #tpu.memory_space<vmem>>, %arg3: memref<1x256xf32, #tpu.memory_space<vmem>>, %arg4: memref<128x128xf32, #tpu.memory_space<vmem>>, %arg5: memref<128x128xf32, #tpu.memory_space<vmem>>, %arg6: memref<16x128xf32, #tpu.memory_space<vmem>>) attributes {dimension_semantics = [#tpu.dimension_semantics<parallel>], iteration_bounds = array<i64: 1>, scalar_prefetch = 0 : i64, scratch_operands = 0 : i64, tpu.core_type = #tpu.core_type<tc>, window_params = [{transform_indices = @transform_0, window_bounds = array<i64: 128, 128>}, {pipeline_mode = #tpu.pipeline_mode<synchronous>, transform_indices = @transform_1, window_bounds = array<i64: 128, 256>}, {pipeline_mode = #tpu.pipeline_mode<synchronous>, transform_indices = @transform_2, window_bounds = array<i64: 1, 256>}, {transform_indices = @transform_3, window_bounds = array<i64: 128, 128>}, {transform_indices = @transform_4, window_bounds = array<i64: 128, 128>}, {transform_indices = @transform_5, window_bounds = array<i64: 16, 128>}]} {
    %c0 = arith.constant 0 : index
    %c0_0 = arith.constant 0 : index
    %0 = vector.load %arg1[%c0, %c0_0] : memref<128x128xf32, #tpu.memory_space<vmem>>, vector<128x128xf32>
    %c0_1 = arith.constant 0 : index
    %c0_2 = arith.constant 0 : index
    %1 = vector.load %arg2[%c0_1, %c0_2] : memref<128x256xf32, #tpu.memory_space<vmem>>, vector<128x256xf32>
    %cst = arith.constant dense<0.000000e+00> : vector<128x256xf32>
    %2 = tpu.matmul %0, %1, %cst {dimension_numbers = #tpu.dot_dimension_numbers<[1], [0], [0], [1], [0, 0, 1, 1], [], []>} : vector<128x128xf32>, vector<128x256xf32>, vector<128x256xf32> -> vector<128x256xf32>
    %c0_3 = arith.constant 0 : index
    %c0_4 = arith.constant 0 : index
    %3 = vector.load %arg3[%c0_3, %c0_4] : memref<1x256xf32, #tpu.memory_space<vmem>>, vector<1x256xf32>
    %4 = vector.broadcast %3 : vector<1x256xf32> to vector<128x256xf32>
    %5 = arith.addf %2, %4 : vector<128x256xf32>
    %6 = vector.extract_strided_slice %5 {offsets = [0, 0], sizes = [128, 128], strides = [1, 1]} : vector<128x256xf32> to vector<128x128xf32>
    %c0_5 = arith.constant 0 : index
    %c0_6 = arith.constant 0 : index
    %7 = vector.load %arg4[%c0_5, %c0_6] : memref<128x128xf32, #tpu.memory_space<vmem>>, vector<128x128xf32>
    tpu.vector_store %arg4[%c0_5, %c0_6], %6 {strides = array<i32>} : memref<128x128xf32, #tpu.memory_space<vmem>>, vector<128x128xf32>,
    %8 = vector.extract_strided_slice %5 {offsets = [0, 128], sizes = [128, 128], strides = [1, 1]} : vector<128x256xf32> to vector<128x128xf32>
    %c0_7 = arith.constant 0 : index
    %c0_8 = arith.constant 0 : index
    %9 = vector.load %arg5[%c0_7, %c0_8] : memref<128x128xf32, #tpu.memory_space<vmem>>, vector<128x128xf32>
    tpu.vector_store %arg5[%c0_7, %c0_8], %8 {strides = array<i32>} : memref<128x128xf32, #tpu.memory_space<vmem>>, vector<128x128xf32>,
    %10 = tpu.transpose %6, [1, 0] : vector<128x128xf32> -> vector<128x128xf32>
    %11 = vector.extract_strided_slice %10 {offsets = [0, 0], sizes = [16, 128], strides = [1, 1]} : vector<128x128xf32> to vector<16x128xf32>
    %c0_9 = arith.constant 0 : index
    %c0_10 = arith.constant 0 : index
    %12 = vector.load %arg6[%c0_9, %c0_10] : memref<16x128xf32, #tpu.memory_space<vmem>>, vector<16x128xf32>
    tpu.vector_store %arg6[%c0_9, %c0_10], %11 {strides = array<i32>} : memref<16x128xf32, #tpu.memory_space<vmem>>, vector<16x128xf32>,
    return
  }
  func.func @transform_0(%arg0: i32) -> (i32, i32) {
    %c0_i32 = arith.constant 0 : i32
    %c0_i32_0 = arith.constant 0 : i32
    return %arg0, %c0_i32 : i32, i32
  }
  func.func @transform_1(%arg0: i32) -> (i32, i32) {
    %c0_i32 = arith.constant 0 : i32
    %c0_i32_0 = arith.constant 0 : i32
    %c0_i32_1 = arith.constant 0 : i32
    return %c0_i32, %c0_i32_0 : i32, i32
  }
  func.func @transform_2(%arg0: i32) -> (i32, i32) {
    %c0_i32 = arith.constant 0 : i32
    %c0_i32_0 = arith.constant 0 : i32
    %c0_i32_1 = arith.constant 0 : i32
    return %c0_i32, %c0_i32_0 : i32, i32
  }
  func.func @transform_3(%arg0: i32) -> (i32, i32) {
    %c0_i32 = arith.constant 0 : i32
    %c0_i32_0 = arith.constant 0 : i32
    return %arg0, %c0_i32 : i32, i32
  }
  func.func @transform_4(%arg0: i32) -> (i32, i32) {
    %c0_i32 = arith.constant 0 : i32
    %c0_i32_0 = arith.constant 0 : i32
    return %arg0, %c0_i32 : i32, i32
  }
  func.func @transform_5(%arg0: i32) -> (i32, i32) {
    %c0_i32 = arith.constant 0 : i32
    %c0_i32_0 = arith.constant 0 : i32
    return %c0_i32, %arg0 : i32, i32
  }
}

</mosaic_0001>

<llo_original>
// kernel: tpu_custom_call.1
$region0: #{tpu_custom_call.1}
  #allocation0 [shape = 'u32[]', space=smem, size = 0x4, offset = 0x4, fixed_abs, tag = 'smem constant byte address 0x4 - core index']
  #allocation1 [shape = 'u32[144,128]{1,0:T(1,128)}', space=vmem, size = 0x12000, scoped, tag = 'internal scratch']
  %s0 = inlined_call_operand.hbm [shape: f32[128,128], index: 0, kind: input, shape index: {}]
  %s1 = inlined_call_operand.hbm [shape: f32[128,256], index: 1, kind: input, shape index: {}]
  %s2 = inlined_call_operand.vmem [shape: f32[1,256], index: 2, kind: input, shape index: {}]
  %s3 = inlined_call_operand.hbm [shape: f32[128,128], index: 3, kind: output, shape index: {0}]
  %s4 = inlined_call_operand.hbm [shape: f32[128,128], index: 4, kind: output, shape index: {1}]
  %s5 = inlined_call_operand.hbm [shape: f32[16,128], index: 5, kind: output, shape index: {2}]
  %6 = xla_tuple %s3, %s4, %s5
  %s7 = sld [smem:[#allocation0]]
  $region46: #{tpu_custom_call.1} parent=0
    _
  %s9 = ssub.s32 1, %s7
  %s10 = scalar_select 0, %s9, %s7
  $region1: #{tpu_custom_call.1} parent=0
    #allocation2 [shape = 'u8[65536]{0}', space=vmem, size = 0x10000, scoped, tag = 'input window, operand 0, single buffered']
    #allocation3 [shape = 's32[1]{0}', space=sflag, size = 0x4, scoped, tag = 'scoped memory for tpu_custom_call.1']
    #allocation4 [shape = 's32[1]{0}', space=sflag, size = 0x4, scoped, tag = 'scoped memory for tpu_custom_call.1']
    #allocation5 [shape = 'u8[131072]{0}', space=vmem, size = 0x20000, scoped, tag = 'input window, operand 1, single buffered']
    #allocation6 [shape = 's32[1]{0}', space=sflag, size = 0x4, scoped, tag = 'scoped memory for tpu_custom_call.1']
    #allocation7 [shape = 'u8[65536]{0}', space=vmem, size = 0x10000, scoped, tag = 'output window, operand 0, single buffered']
    #allocation8 [shape = 'u8[65536]{0}', space=vmem, size = 0x10000, scoped, tag = 'output window, operand 1, single buffered']
    #allocation9 [shape = 's32[1]{0}', space=sflag, size = 0x4, scoped, tag = 'scoped memory for tpu_custom_call.1']
    #allocation10 [shape = 'u8[8192]{0}', space=vmem, size = 0x2000, scoped, tag = 'output window, operand 2, single buffered']
    %11 = vsyncpa [#allocation3], 0
    %12 = vsyncpa [#allocation6], 0
    %13 = vsyncpa [#allocation4], 0
    %14 = vsyncpa [#allocation9], 0
    // Predicated region
    $region2: #{tpu_custom_call.1} parent=1 // pred_check
      _
    $region3: #{tpu_custom_call.1} parent=1 // pred_check_branch
      %16 = sbr.rel (0) target = $region5
    $region4: #{tpu_custom_call.1} parent=1 // pred_region
      %s18 = ssub.s32 2048, 2048
      %19 = vsyncadd [#allocation3], %s18
      %s20 = sshll.u32 [#allocation2], 4
      %s21 = int_to_ptr.vmem [resolvable:$true] %s20
      %26 = dma.hbm_to_vmem [thread:$0]  %s0, 2048, %s21, [#allocation3], 128, 128, 8
    $region5: #{tpu_custom_call.1} parent=1 // pred_fallthru
      _
    // Predicated region
    $region6: #{tpu_custom_call.1} parent=1 // pred_check
      _
    $region7: #{tpu_custom_call.1} parent=1 // pred_check_branch
      %28 = sbr.rel (0) target = $region9
    $region8: #{tpu_custom_call.1} parent=1 // pred_region
      %s30 = ssub.s32 4096, 4096
      %31 = vsyncadd [#allocation6], %s30
      %s32 = sshll.u32 [#allocation5], 4
      %s33 = int_to_ptr.vmem [resolvable:$true] %s32
      %38 = dma.hbm_to_vmem [thread:$0]  %s1, 4096, %s33, [#allocation6], 256, 256, 16
    $region9: #{tpu_custom_call.1} parent=1 // pred_fallthru
      _
    // Predicated region
    $region10: #{tpu_custom_call.1} parent=1 // pred_check
      _
    $region11: #{tpu_custom_call.1} parent=1 // pred_check_branch
      %40 = sbr.rel (0) target = $region13
    $region12: #{tpu_custom_call.1} parent=1 // pred_region
      _
    $region13: #{tpu_custom_call.1} parent=1 // pred_fallthru
      _
    // Predicated region
    $region14: #{tpu_custom_call.1} parent=1 // pred_check
      _
    $region15: #{tpu_custom_call.1} parent=1 // pred_check_branch
      %42 = sbr.rel (0) target = $region17
    $region16: #{tpu_custom_call.1} parent=1 // pred_region
      %43 = dma.done [#allocation3], 2048
    $region17: #{tpu_custom_call.1} parent=1 // pred_fallthru
      _
    // Predicated region
    $region18: #{tpu_custom_call.1} parent=1 // pred_check
      _
    $region19: #{tpu_custom_call.1} parent=1 // pred_check_branch
      %45 = sbr.rel (0) target = $region21
    $region20: #{tpu_custom_call.1} parent=1 // pred_region
      %46 = dma.done [#allocation6], 4096
    $region21: #{tpu_custom_call.1} parent=1 // pred_fallthru
      _
    %v47 = vld [vmem:[#allocation2] sm:$0xff]
    %v48 = vld [vmem:[#allocation2 + $0x8] sm:$0xff]
    %v49 = vld [vmem:[#allocation2 + $0x10] sm:$0xff]
    %v50 = vld [vmem:[#allocation2 + $0x18] sm:$0xff]
    %v51 = vld [vmem:[#allocation2 + $0x20] sm:$0xff]
    %v52 = vld [vmem:[#allocation2 + $0x28] sm:$0xff]
    %v53 = vld [vmem:[#allocation2 + $0x30] sm:$0xff]
    %v54 = vld [vmem:[#allocation2 + $0x38] sm:$0xff]
    %v55 = vld [vmem:[#allocation2 + $0x40] sm:$0xff]
    %v56 = vld [vmem:[#allocation2 + $0x48] sm:$0xff]
    %v57 = vld [vmem:[#allocation2 + $0x50] sm:$0xff]
    %v58 = vld [vmem:[#allocation2 + $0x58] sm:$0xff]
    %v59 = vld [vmem:[#allocation2 + $0x60] sm:$0xff]
    %v60 = vld [vmem:[#allocation2 + $0x68] sm:$0xff]
    %v61 = vld [vmem:[#allocation2 + $0x70] sm:$0xff]
    %v62 = vld [vmem:[#allocation2 + $0x78] sm:$0xff]
    %v63 = vld [vmem:[#allocation5] sm:$0xff]
    %v64 = vld [vmem:[#allocation5 + $0x8] sm:$0xff]
    %v65 = vld [vmem:[#allocation5 + $0x10] sm:$0xff]
    %v66 = vld [vmem:[#allocation5 + $0x18] sm:$0xff]
    %v67 = vld [vmem:[#allocation5 + $0x20] sm:$0xff]
    %v68 = vld [vmem:[#allocation5 + $0x28] sm:$0xff]
    %v69 = vld [vmem:[#allocation5 + $0x30] sm:$0xff]
    %v70 = vld [vmem:[#allocation5 + $0x38] sm:$0xff]
    %v71 = vld [vmem:[#allocation5 + $0x40] sm:$0xff]
    %v72 = vld [vmem:[#allocation5 + $0x48] sm:$0xff]
    %v73 = vld [vmem:[#allocation5 + $0x50] sm:$0xff]
    %v74 = vld [vmem:[#allocation5 + $0x58] sm:$0xff]
    %v75 = vld [vmem:[#allocation5 + $0x60] sm:$0xff]
    %v76 = vld [vmem:[#allocation5 + $0x68] sm:$0xff]
    %v77 = vld [vmem:[#allocation5 + $0x70] sm:$0xff]
    %v78 = vld [vmem:[#allocation5 + $0x78] sm:$0xff]
    %v79 = vld [vmem:[#allocation5 + $0x80] sm:$0xff]
    %v80 = vld [vmem:[#allocation5 + $0x88] sm:$0xff]
    %v81 = vld [vmem:[#allocation5 + $0x90] sm:$0xff]
    %v82 = vld [vmem:[#allocation5 + $0x98] sm:$0xff]
    %v83 = vld [vmem:[#allocation5 + $0xa0] sm:$0xff]
    %v84 = vld [vmem:[#allocation5 + $0xa8] sm:$0xff]
    %v85 = vld [vmem:[#allocation5 + $0xb0] sm:$0xff]
    %v86 = vld [vmem:[#allocation5 + $0xb8] sm:$0xff]
    %v87 = vld [vmem:[#allocation5 + $0xc0] sm:$0xff]
    %v88 = vld [vmem:[#allocation5 + $0xc8] sm:$0xff]
    %v89 = vld [vmem:[#allocation5 + $0xd0] sm:$0xff]
    %v90 = vld [vmem:[#allocation5 + $0xd8] sm:$0xff]
    %v91 = vld [vmem:[#allocation5 + $0xe0] sm:$0xff]
    %v92 = vld [vmem:[#allocation5 + $0xe8] sm:$0xff]
    %v93 = vld [vmem:[#allocation5 + $0xf0] sm:$0xff]
    %v94 = vld [vmem:[#allocation5 + $0xf8] sm:$0xff]
    %v95 = vld [vmem:[%s2] sm:$0x3]
    %v97 = vlaneseq
    %v98 = vshrl.u32 %v97, 7
    %v99 = vsub.s32 0, %v98
    %v100 = vrot.slane %v95, %v99
    %v101 = vlaneseq
    %v102 = vshrl.u32 %v101, 7
    %v103 = vsub.s32 1, %v102
    %v104 = vrot.slane %v95, %v103
    %107 = vmatprep.subr.mxu0 %v94
    %108 = vmatpush1.msra.mxu0 %v93
    %109 = vmatprep.subr.mxu0 %v92
    %110 = vmatpush1.msra.mxu0 %v91
    %111 = vmatprep.subr.mxu0 %v90
    %112 = vmatpush1.msra.mxu0 %v89
    %113 = vmatprep.subr.mxu0 %v88
    %114 = vmatpush1.msra.mxu0 %v87
    %115 = vmatprep.subr.mxu0 %v86
    %116 = vmatpush1.msra.mxu0 %v85
    %117 = vmatprep.subr.mxu0 %v84
    %118 = vmatpush1.msra.mxu0 %v83
    %119 = vmatprep.subr.mxu0 %v82
    %120 = vmatpush1.msra.mxu0 %v81
    %121 = vmatprep.subr.mxu0 %v80
    %122 = vmatpush1.msra.mxu0 %v79
    %123 = vmatprep.subr.mxu0 %v78
    %124 = vmatpush1.msra.mxu0 %v77
    %125 = vmatprep.subr.mxu0 %v76
    %126 = vmatpush1.msra.mxu0 %v75
    %127 = vmatprep.subr.mxu0 %v74
    %128 = vmatpush1.msra.mxu0 %v73
    %129 = vmatprep.subr.mxu0 %v72
    %130 = vmatpush1.msra.mxu0 %v71
    %131 = vmatprep.subr.mxu0 %v70
    %132 = vmatpush1.msra.mxu0 %v69
    %133 = vmatprep.subr.mxu0 %v68
    %134 = vmatpush1.msra.mxu0 %v67
    %135 = vmatprep.subr.mxu0 %v66
    %136 = vmatpush1.msra.mxu0 %v65
    %137 = vmatprep.subr.mxu0 %v64
    %138 = vmatpush1.msra.mxu0 %v63
    %139 = vmatprep.subr.mxu0 0.0
    %140 = vmatpush2.msra.mxu0 0.0
    %141 = vmatprep.subr.mxu0 0.0
    %142 = vmatpush2.msra.mxu0 0.0
    %143 = vmatprep.subr.mxu0 0.0
    %144 = vmatpush2.msra.mxu0 0.0
    %145 = vmatprep.subr.mxu0 0.0
    %146 = vmatpush2.msra.mxu0 0.0
    %147 = vmatprep.subr.mxu0 0.0
    %148 = vmatpush2.msra.mxu0 0.0
    %149 = vmatprep.subr.mxu0 0.0
    %150 = vmatpush2.msra.mxu0 0.0
    %151 = vmatprep.subr.mxu0 0.0
    %152 = vmatpush2.msra.mxu0 0.0
    %153 = vmatprep.subr.mxu0 0.0
    %154 = vmatpush2.msra.mxu0 0.0
    %155 = vmatprep.subr.mxu0 0.0
    %156 = vmatpush2.msra.mxu0 0.0
    %157 = vmatprep.subr.mxu0 0.0
    %158 = vmatpush2.msra.mxu0 0.0
    %159 = vmatprep.subr.mxu0 0.0
    %160 = vmatpush2.msra.mxu0 0.0
    %161 = vmatprep.subr.mxu0 0.0
    %162 = vmatpush2.msra.mxu0 0.0
    %163 = vmatprep.subr.mxu0 0.0
    %164 = vmatpush2.msra.mxu0 0.0
    %165 = vmatprep.subr.mxu0 0.0
    %166 = vmatpush2.msra.mxu0 0.0
    %167 = vmatprep.subr.mxu0 0.0
    %168 = vmatpush2.msra.mxu0 0.0
    %169 = vmatprep.subr.mxu0 0.0
    %170 = vmatpush2.msra.mxu0 0.0
    %171 = vmatprep.mubr.f32.mxu0 0.0
    %172 = vmatmul.mubr.f32.gmra.mxu0 %v47
    %v173 = vpop.f32.mrf.mxu0
    %v174 = vadd.f32 %v100, %v173
    %v175 = vpop.f32.mrf.mxu0
    %v176 = vadd.f32 %v104, %v175
    %177 = vmatprep.mubr.f32.mxu0 0.0
    %178 = vmatmul.mubr.f32.gmra.mxu0 %v48
    %v179 = vpop.f32.mrf.mxu0
    %v180 = vadd.f32 %v100, %v179
    %v181 = vpop.f32.mrf.mxu0
    %v182 = vadd.f32 %v104, %v181
    %183 = vmatprep.mubr.f32.mxu0 0.0
    %184 = vmatmul.mubr.f32.gmra.mxu0 %v49
    %v185 = vpop.f32.mrf.mxu0
    %v186 = vadd.f32 %v100, %v185
    %v187 = vpop.f32.mrf.mxu0
    %v188 = vadd.f32 %v104, %v187
    %189 = vmatprep.mubr.f32.mxu0 0.0
    %190 = vmatmul.mubr.f32.gmra.mxu0 %v50
    %v191 = vpop.f32.mrf.mxu0
    %v192 = vadd.f32 %v100, %v191
    %v193 = vpop.f32.mrf.mxu0
    %v194 = vadd.f32 %v104, %v193
    %195 = vmatprep.mubr.f32.mxu0 0.0
    %196 = vmatmul.mubr.f32.gmra.mxu0 %v51
    %v197 = vpop.f32.mrf.mxu0
    %v198 = vadd.f32 %v100, %v197
    %v199 = vpop.f32.mrf.mxu0
    %v200 = vadd.f32 %v104, %v199
    %201 = vmatprep.mubr.f32.mxu0 0.0
    %202 = vmatmul.mubr.f32.gmra.mxu0 %v52
    %v203 = vpop.f32.mrf.mxu0
    %v204 = vadd.f32 %v100, %v203
    %v205 = vpop.f32.mrf.mxu0
    %v206 = vadd.f32 %v104, %v205
    %207 = vmatprep.mubr.f32.mxu0 0.0
    %208 = vmatmul.mubr.f32.gmra.mxu0 %v53
    %v209 = vpop.f32.mrf.mxu0
    %v210 = vadd.f32 %v100, %v209
    %v211 = vpop.f32.mrf.mxu0
    %v212 = vadd.f32 %v104, %v211
    %213 = vmatprep.mubr.f32.mxu0 0.0
    %214 = vmatmul.mubr.f32.gmra.mxu0 %v54
    %v215 = vpop.f32.mrf.mxu0
    %v216 = vadd.f32 %v100, %v215
    %v217 = vpop.f32.mrf.mxu0
    %v218 = vadd.f32 %v104, %v217
    %219 = vmatprep.mubr.f32.mxu0 0.0
    %220 = vmatmul.mubr.f32.gmra.mxu0 %v55
    %v221 = vpop.f32.mrf.mxu0
    %v222 = vadd.f32 %v100, %v221
    %v223 = vpop.f32.mrf.mxu0
    %v224 = vadd.f32 %v104, %v223
    %225 = vmatprep.mubr.f32.mxu0 0.0
    %226 = vmatmul.mubr.f32.gmra.mxu0 %v56
    %v227 = vpop.f32.mrf.mxu0
    %v228 = vadd.f32 %v100, %v227
    %v229 = vpop.f32.mrf.mxu0
    %v230 = vadd.f32 %v104, %v229
    %231 = vmatprep.mubr.f32.mxu0 0.0
    %232 = vmatmul.mubr.f32.gmra.mxu0 %v57
    %v233 = vpop.f32.mrf.mxu0
    %v234 = vadd.f32 %v100, %v233
    %v235 = vpop.f32.mrf.mxu0
    %v236 = vadd.f32 %v104, %v235
    %237 = vmatprep.mubr.f32.mxu0 0.0
    %238 = vmatmul.mubr.f32.gmra.mxu0 %v58
    %v239 = vpop.f32.mrf.mxu0
    %v240 = vadd.f32 %v100, %v239
    %v241 = vpop.f32.mrf.mxu0
    %v242 = vadd.f32 %v104, %v241
    %243 = vmatprep.mubr.f32.mxu0 0.0
    %244 = vmatmul.mubr.f32.gmra.mxu0 %v59
    %v245 = vpop.f32.mrf.mxu0
    %v246 = vadd.f32 %v100, %v245
    %v247 = vpop.f32.mrf.mxu0
    %v248 = vadd.f32 %v104, %v247
    %249 = vmatprep.mubr.f32.mxu0 0.0
    %250 = vmatmul.mubr.f32.gmra.mxu0 %v60
    %v251 = vpop.f32.mrf.mxu0
    %v252 = vadd.f32 %v100, %v251
    %v253 = vpop.f32.mrf.mxu0
    %v254 = vadd.f32 %v104, %v253
    %255 = vmatprep.mubr.f32.mxu0 0.0
    %256 = vmatmul.mubr.f32.gmra.mxu0 %v61
    %v257 = vpop.f32.mrf.mxu0
    %v258 = vadd.f32 %v100, %v257
    %v259 = vpop.f32.mrf.mxu0
    %v260 = vadd.f32 %v104, %v259
    %261 = vmatprep.mubr.f32.mxu0 0.0
    %262 = vmatmul.mubr.f32.gmra.mxu0 %v62
    %v263 = vpop.f32.mrf.mxu0
    %v264 = vadd.f32 %v100, %v263
    %v265 = vpop.f32.mrf.mxu0
    %v266 = vadd.f32 %v104, %v265
    %267 = vdwg.mxu0
    %268 = vst [vmem:[#allocation7] sm:$0xff] %v174
    %269 = vst [vmem:[#allocation7 + $0x8] sm:$0xff] %v180
    %270 = vst [vmem:[#allocation7 + $0x10] sm:$0xff] %v186
    %271 = vst [vmem:[#allocation7 + $0x18] sm:$0xff] %v192
    %272 = vst [vmem:[#allocation7 + $0x20] sm:$0xff] %v198
    %273 = vst [vmem:[#allocation7 + $0x28] sm:$0xff] %v204
    %274 = vst [vmem:[#allocation7 + $0x30] sm:$0xff] %v210
    %275 = vst [vmem:[#allocation7 + $0x38] sm:$0xff] %v216
    %276 = vst [vmem:[#allocation7 + $0x40] sm:$0xff] %v222
    %277 = vst [vmem:[#allocation7 + $0x48] sm:$0xff] %v228
    %278 = vst [vmem:[#allocation7 + $0x50] sm:$0xff] %v234
    %279 = vst [vmem:[#allocation7 + $0x58] sm:$0xff] %v240
    %280 = vst [vmem:[#allocation7 + $0x60] sm:$0xff] %v246
    %281 = vst [vmem:[#allocation7 + $0x68] sm:$0xff] %v252
    %282 = vst [vmem:[#allocation7 + $0x70] sm:$0xff] %v258
    %283 = vst [vmem:[#allocation7 + $0x78] sm:$0xff] %v264
    %284 = vst [vmem:[#allocation8] sm:$0xff] %v176
    %285 = vst [vmem:[#allocation8 + $0x8] sm:$0xff] %v182
    %286 = vst [vmem:[#allocation8 + $0x10] sm:$0xff] %v188
    %287 = vst [vmem:[#allocation8 + $0x18] sm:$0xff] %v194
    %288 = vst [vmem:[#allocation8 + $0x20] sm:$0xff] %v200
    %289 = vst [vmem:[#allocation8 + $0x28] sm:$0xff] %v206
    %290 = vst [vmem:[#allocation8 + $0x30] sm:$0xff] %v212
    %291 = vst [vmem:[#allocation8 + $0x38] sm:$0xff] %v218
    %292 = vst [vmem:[#allocation8 + $0x40] sm:$0xff] %v224
    %293 = vst [vmem:[#allocation8 + $0x48] sm:$0xff] %v230
    %294 = vst [vmem:[#allocation8 + $0x50] sm:$0xff] %v236
    %295 = vst [vmem:[#allocation8 + $0x58] sm:$0xff] %v242
    %296 = vst [vmem:[#allocation8 + $0x60] sm:$0xff] %v248
    %297 = vst [vmem:[#allocation8 + $0x68] sm:$0xff] %v254
    %298 = vst [vmem:[#allocation8 + $0x70] sm:$0xff] %v260
    %299 = vst [vmem:[#allocation8 + $0x78] sm:$0xff] %v266
    %300 = vxpose.xlu0.b32.start [1/16] %v174, 128
    %301 = vxpose.xlu0.b32.cont [2/16] %v180, 128
    %302 = vxpose.xlu0.b32.cont [3/16] %v186, 128
    %303 = vxpose.xlu0.b32.cont [4/16] %v192, 128
    %304 = vxpose.xlu0.b32.cont [5/16] %v198, 128
    %305 = vxpose.xlu0.b32.cont [6/16] %v204, 128
    %306 = vxpose.xlu0.b32.cont [7/16] %v210, 128
    %307 = vxpose.xlu0.b32.cont [8/16] %v216, 128
    %308 = vxpose.xlu0.b32.cont [9/16] %v222, 128
    %309 = vxpose.xlu0.b32.cont [10/16] %v228, 128
    %310 = vxpose.xlu0.b32.cont [11/16] %v234, 128
    %311 = vxpose.xlu0.b32.cont [12/16] %v240, 128
    %312 = vxpose.xlu0.b32.cont [13/16] %v246, 128
    %313 = vxpose.xlu0.b32.cont [14/16] %v252, 128
    %314 = vxpose.xlu0.b32.cont [15/16] %v258, 128
    %315 = vxpose.xlu0.b32.end [16/16] %v264, 128
    %v316 = vpop.trf.xlu0
    %v317 = vpop.trf.xlu0
    %v318 = vpop.trf.xlu0
    %v319 = vpop.trf.xlu0
    %v320 = vpop.trf.xlu0
    %v321 = vpop.trf.xlu0
    %v322 = vpop.trf.xlu0
    %v323 = vpop.trf.xlu0
    %v324 = vpop.trf.xlu0
    %v325 = vpop.trf.xlu0
    %v326 = vpop.trf.xlu0
    %v327 = vpop.trf.xlu0
    %v328 = vpop.trf.xlu0
    %v329 = vpop.trf.xlu0
    %v330 = vpop.trf.xlu0
    %v331 = vpop.trf.xlu0
    %332 = vst [vmem:[#allocation10] sm:$0xff] %v316
    %333 = vst [vmem:[#allocation10 + $0x8] sm:$0xff] %v317
    // Predicated region
    $region22: #{tpu_custom_call.1} parent=1 // pred_check
      _
    $region23: #{tpu_custom_call.1} parent=1 // pred_check_branch
      %335 = sbr.rel (0) target = $region25
    $region24: #{tpu_custom_call.1} parent=1 // pred_region
      %s337 = ssub.s32 2048, 2048
      %338 = vsyncadd [#allocation4], %s337
      %s339 = sshll.u32 [#allocation7], 4
      %s340 = int_to_ptr.vmem [resolvable:$true] %s339
      %345 = dma.vmem_to_hbm [thread:$0]  %s340, 2048, %s3, [#allocation4], 128, 128, 8
    $region25: #{tpu_custom_call.1} parent=1 // pred_fallthru
      _
    // Predicated region
    $region26: #{tpu_custom_call.1} parent=1 // pred_check
      _
    $region27: #{tpu_custom_call.1} parent=1 // pred_check_branch
      %347 = sbr.rel (0) target = $region29
    $region28: #{tpu_custom_call.1} parent=1 // pred_region
      %s349 = ssub.s32 2048, 2048
      %350 = vsyncadd [#allocation9], %s349
      %s351 = sshll.u32 [#allocation8], 4
      %s352 = int_to_ptr.vmem [resolvable:$true] %s351
      %357 = dma.vmem_to_hbm [thread:$0]  %s352, 2048, %s4, [#allocation9], 128, 128, 8
    $region29: #{tpu_custom_call.1} parent=1 // pred_fallthru
      _
    // Predicated region
    $region30: #{tpu_custom_call.1} parent=1 // pred_check
      _
    $region31: #{tpu_custom_call.1} parent=1 // pred_check_branch
      %359 = sbr.rel (0) target = $region33
    $region32: #{tpu_custom_call.1} parent=1 // pred_region
      %s361 = ssub.s32 256, 256
      %362 = vsyncadd [#allocation9], %s361
      %s363 = sshll.u32 [#allocation10], 4
      %s364 = int_to_ptr.vmem [resolvable:$true] %s363
      %369 = dma.vmem_to_hbm [thread:$0]  %s364, 256, %s5, [#allocation9], 128, 128, 8
    $region33: #{tpu_custom_call.1} parent=1 // pred_fallthru
      _
    // Predicated region
    $region34: #{tpu_custom_call.1} parent=1 // pred_check
      _
    $region35: #{tpu_custom_call.1} parent=1 // pred_check_branch
      %371 = sbr.rel (0) target = $region37
    $region36: #{tpu_custom_call.1} parent=1 // pred_region
      %372 = dma.done [#allocation4], 2048
    $region37: #{tpu_custom_call.1} parent=1 // pred_fallthru
      _
    // Predicated region
    $region38: #{tpu_custom_call.1} parent=1 // pred_check
      _
    $region39: #{tpu_custom_call.1} parent=1 // pred_check_branch
      %374 = sbr.rel (0) target = $region41
    $region40: #{tpu_custom_call.1} parent=1 // pred_region
      %375 = dma.done [#allocation9], 2048
    $region41: #{tpu_custom_call.1} parent=1 // pred_fallthru
      _
    // Predicated region
    $region42: #{tpu_custom_call.1} parent=1 // pred_check
      _
    $region43: #{tpu_custom_call.1} parent=1 // pred_check_branch
      %377 = sbr.rel (0) target = $region45
    $region44: #{tpu_custom_call.1} parent=1 // pred_region
      %378 = dma.done [#allocation9], 256
    $region45: #{tpu_custom_call.1} parent=1 // pred_fallthru
      _
    %379 = vsyncpa [#allocation3], 1
    %380 = vsyncpa [#allocation6], 1
    %381 = vsyncpa [#allocation4], 1
    %382 = vsyncpa [#allocation9], 1

</llo_original>
